<compile_context>
chip_gen: v7x
topology: tpu7x:2x2x1
jax: 0.10.0
libtpu: 0.0.40
codegen_flags: <defaults>
</compile_context>

<pallas_src>
import functools

import jax
import jax.numpy as jnp
from jax.experimental import pallas as pl
from jax.experimental.pallas import tpu as pltpu


# ----------------------------------------------------------------------------
# One-time probe: pin the lane-rotate direction of pltpu.roll on this backend.
# ----------------------------------------------------------------------------
def _roll_probe_kernel(x_ref, o_ref):
    o_ref[...] = pltpu.roll(x_ref[...], 1, 1)


def probe_roll_convention():
    """+1 if pltpu.roll(x, s, ax) == jnp.roll(x, s, ax) (out[l] = x[l-s]), else -1."""
    x = jnp.tile(jax.lax.iota(jnp.float32, 128)[None, :], (8, 1))
    y = pl.pallas_call(
        _roll_probe_kernel,
        out_shape=jax.ShapeDtypeStruct((8, 128), jnp.float32),
    )(x)
    v = float(y[0, 1])  # jnp.roll convention -> x[0] = 0 ; opposite -> x[2] = 2
    return 1 if abs(v - 0.0) < abs(v - 2.0) else -1


# ----------------------------------------------------------------------------
# Kernel 1: fused sub-pixel ConvTranspose2d(k=4, s=2, p=1) layer.
#
# grid = (n_spatial_blocks,).  Per step the kernel:
#   * loads the 3 row-shifted flattened input copies for this spatial block,
#   * derives the +/-1 column shifts in VMEM (lane roll + row-edge mask),
#   * accumulates the 4 taps of the per-parity 2x2 conv into f32 registers
#     (16 small MXU pushes, Python-unrolled),
#   * fuses bias + activation and writes 4 lane-dense (Cout, blk) parity outputs.
# ----------------------------------------------------------------------------
def _subpixel_convt_kernel(x_ref, w_ref, b_ref, o_ref, *, n_cols, activation, roll_sign):
    """x_ref (3, Cin, blk) bf16 | w_ref (2,2,4,Cout,Cin) bf16 | b_ref (Cout,1) f32
    o_ref (2, 2, Cout, blk)."""
    _, _, blk = x_ref.shape
    cin = x_ref.shape[1]
    cout = w_ref.shape[3]

    # Column index (within an image row) of each lane.  blk is a multiple of n_cols,
    # so every image row lies fully inside the block and only the row edges need masking.
    col = jax.lax.broadcasted_iota(jnp.int32, (cin, blk), 1) % n_cols
    at_left = col == 0
    at_right = col == (n_cols - 1)

    # Lane-shift amounts producing "value of lane l-1" / "value of lane l+1".
    if roll_sign == 1:       # pltpu.roll matches jnp.roll: out[l] = x[(l - shift) % blk]
        s_prev, s_next = 1, blk - 1
    else:                    # opposite convention: out[l] = x[(l + shift) % blk]
        s_prev, s_next = blk - 1, 1

    acc = [[jnp.zeros((cout, blk), jnp.float32) for _ in range(2)] for _ in range(2)]
    for a in range(3):                                   # row shift of the padded input
        xa = x_ref[a]                                    # column shift cc = 1
        x_prev = jnp.where(at_left, 0, pltpu.roll(xa, s_prev, 1)).astype(xa.dtype)
        x_next = jnp.where(at_right, 0, pltpu.roll(xa, s_next, 1)).astype(xa.dtype)
        xs = (x_prev, xa, x_next)                        # column shifts cc = 0, 1, 2
        for ph in range(2):
            dh = a - ph
            if dh not in (0, 1):
                continue
            for pw in range(2):
                for dw in range(2):
                    acc[ph][pw] += jnp.dot(
                        w_ref[ph, pw, 2 * dh + dw], xs[pw + dw],
                        preferred_element_type=jnp.float32)

    b = b_ref[...]
    for ph in range(2):
        for pw in range(2):
            y = acc[ph][pw] + b
            if activation == "relu":
                y = jnp.maximum(y, 0.0)
            elif activation == "sigmoid":
                y = jax.nn.sigmoid(y)
            o_ref[ph, pw] = y.astype(o_ref.dtype)


def conv_transpose_subpixel(xcm, w_sub, bias, activation, *, roll_sign,
                            out_dtype=jnp.bfloat16, channels_major_out=True,
                            max_block=8192, min_parallel_blocks=4):
    """ConvTranspose2d(k=4,s=2,p=1).  xcm channels-major (Cin,B,H,W) ->
    (Cout,B,2H,2W) channels-major, or (B,Cout,2H,2W) NCHW if channels_major_out=False."""
    Cin, B, H, W = xcm.shape
    Cout = w_sub.shape[3]
    S = B * H * W

    # 3 row-shifted, flattened copies of the row-zero-padded input (channels-major):
    #   xc[a][c, (b*H+i)*W + j] = x[c, b, i+a-1, j]   (0 outside the image rows).
    xp = jnp.pad(xcm.astype(jnp.bfloat16), ((0, 0), (0, 0), (1, 1), (0, 0)))
    xc = jnp.stack([xp[:, :, a:a + H, :].reshape(Cin, S) for a in range(3)], axis=0)

    blk = min(S, max_block)
    while S % blk:
        blk //= 2
    while S // blk < min_parallel_blocks and blk > 128:   # keep both v7x TCs fed
        blk //= 2
    assert blk % 128 == 0 and blk % W == 0 and S % blk == 0, (S, W, blk)
    n_r = S // blk

    kernel = functools.partial(_subpixel_convt_kernel, n_cols=W,
                               activation=activation, roll_sign=roll_sign)
    y = pl.pallas_call(
        kernel,
        out_shape=jax.ShapeDtypeStruct((2, 2, Cout, S), out_dtype),
        grid_spec=pltpu.PrefetchScalarGridSpec(
            num_scalar_prefetch=0,
            grid=(n_r,),
            in_specs=[
                pl.BlockSpec((3, Cin, blk), lambda r: (0, 0, r)),
                pl.BlockSpec((2, 2, 4, Cout, Cin), lambda r: (0, 0, 0, 0, 0)),
                pl.BlockSpec((Cout, 1), lambda r: (0, 0)),
            ],
            out_specs=pl.BlockSpec((2, 2, Cout, blk), lambda r: (0, 0, 0, r)),
        ),
        compiler_params=pltpu.CompilerParams(dimension_semantics=("parallel",)),
    )(xc, w_sub, bias)

    # Parity interleave: y[ph, pw, c, (b*H+i)*W + j] -> out[..., 2i+ph, 2j+pw].
    y = y.reshape(2, 2, Cout, B, H, W)
    if channels_major_out:
        y = jnp.transpose(y, (2, 3, 4, 0, 5, 1))          # (C, B, H, 2, W, 2)
        return y.reshape(Cout, B, 2 * H, 2 * W)
    y = jnp.transpose(y, (3, 2, 4, 0, 5, 1))              # (B, C, H, 2, W, 2)
    return y.reshape(B, Cout, 2 * H, 2 * W)


# ----------------------------------------------------------------------------
# Kernel 2: Linear(latent_dim, 256*16*16), tiled along N only (M, K tiny).
# ----------------------------------------------------------------------------
def _linear_kernel(z_ref, w_ref, b_ref, o_ref):
    acc = jnp.dot(z_ref[...], w_ref[...], preferred_element_type=jnp.float32)
    o_ref[...] = (acc + b_ref[...]).astype(o_ref.dtype)


def linear_pallas(z, wT, bias, out_dtype=jnp.bfloat16, max_tn=16384):
    M, K = z.shape
    K2, N = wT.shape
    assert K == K2 and bias.shape == (1, N)
    tn = min(N, max_tn)
    while N % tn:
        tn //= 2
    assert tn % 128 == 0
    return pl.pallas_call(
        _linear_kernel,
        out_shape=jax.ShapeDtypeStruct((M, N), out_dtype),
        grid_spec=pltpu.PrefetchScalarGridSpec(
            num_scalar_prefetch=0,
            grid=(N // tn,),
            in_specs=[
                pl.BlockSpec((M, K), lambda j: (0, 0)),
                pl.BlockSpec((K, tn), lambda j: (0, j)),
                pl.BlockSpec((1, tn), lambda j: (0, j)),
            ],
            out_specs=pl.BlockSpec((M, tn), lambda j: (0, j)),
        ),
        compiler_params=pltpu.CompilerParams(dimension_semantics=("parallel",)),
    )(z.astype(jnp.bfloat16), wT, bias)


# ----------------------------------------------------------------------------
# One-time weight packing (hoisted out of the forward pass).
#   ConvTranspose2d(k=4,s=2,p=1): out[2i+ph, 2j+pw] uses kernel rows KSEL[ph]
#   against padded input rows (i+ph+dh), dh in {0,1}; same along width.
# ----------------------------------------------------------------------------
_KSEL = ((3, 1), (2, 0))


def prepare_params(raw):
    p = {
        "lin_wT": raw["lin_w"].T.astype(jnp.bfloat16),                 # (latent, 65536)
        "lin_b": raw["lin_b"].reshape(1, -1).astype(jnp.float32),
    }
    for i in (1, 2, 3, 4):
        w = raw[f"ct{i}_w"]                                            # (Cin, Cout, 4, 4)
        parities = []
        for ph in range(2):
            row = []
            for pw in range(2):
                taps = [jnp.transpose(w[:, :, _KSEL[ph][dh], _KSEL[pw][dw]], (1, 0))
                        for dh in range(2) for dw in range(2)]         # each (Cout, Cin)
                row.append(jnp.stack(taps, axis=0))                    # (4, Cout, Cin)
            parities.append(jnp.stack(row, axis=0))                    # (2, 4, Cout, Cin)
        p[f"w{i}"] = jnp.stack(parities, axis=0).astype(jnp.bfloat16)  # (2,2,4,Cout,Cin)
        p[f"b{i}"] = raw[f"ct{i}_b"].reshape(-1, 1).astype(jnp.float32)
    return p


# ----------------------------------------------------------------------------
# Decoder forward (matches the PyTorch module, output NCHW f32).
# ----------------------------------------------------------------------------
def decoder_forward(z, params, *, roll_sign=1):
    B = z.shape[0]
    x = linear_pallas(z, params["lin_wT"], params["lin_b"])            # (B, 65536) bf16
    x = x.reshape(B, 256, 16, 16)                                      # like .view(-1,256,16,16)
    x = jnp.transpose(x, (1, 0, 2, 3))                                 # channels-major (256,B,16,16)
    x = conv_transpose_subpixel(x, params["w1"], params["b1"], "relu",
                                roll_sign=roll_sign)                   # (128,B, 32, 32)
    x = conv_transpose_subpixel(x, params["w2"], params["b2"], "relu",
                                roll_sign=roll_sign)                   # ( 64,B, 64, 64)
    x = conv_transpose_subpixel(x, params["w3"], params["b3"], "relu",
                                roll_sign=roll_sign)                   # ( 32,B,128,128)
    x = conv_transpose_subpixel(x, params["w4"], params["b4"], "sigmoid",
                                roll_sign=roll_sign, out_dtype=jnp.float32,
                                channels_major_out=False)              # (B, C,256,256) NCHW
    return x


# ----------------------------------------------------------------------------
# Pure-JAX f32 reference of the PyTorch module (for the numerical checks).
# ----------------------------------------------------------------------------
def _ref_conv_transpose(x, w, b):
    B, Cin, H, W = x.shape
    Cout = w.shape[1]
    OH, OW = 2 * H, 2 * W
    up = jnp.zeros((B, Cin, 2 * H - 1, 2 * W - 1), x.dtype).at[:, :, ::2, ::2].set(x)
    up = jnp.pad(up, ((0, 0), (0, 0), (2, 2), (2, 2)))
    wf = w[:, :, ::-1, ::-1]
    out = jnp.zeros((B, Cout, OH, OW), x.dtype)
    for kh in range(4):
        for kw in range(4):
            out = out + jnp.einsum("bchw,cd->bdhw",
                                   up[:, :, kh:kh + OH, kw:kw + OW], wf[:, :, kh, kw])
    return out + b[None, :, None, None]


def decoder_reference(z, raw):
    B = z.shape[0]
    x = (z @ raw["lin_w"].T + raw["lin_b"]).reshape(B, 256, 16, 16)
    x = jax.nn.relu(_ref_conv_transpose(x, raw["ct1_w"], raw["ct1_b"]))
    x = jax.nn.relu(_ref_conv_transpose(x, raw["ct2_w"], raw["ct2_b"]))
    x = jax.nn.relu(_ref_conv_transpose(x, raw["ct3_w"], raw["ct3_b"]))
    return jax.nn.sigmoid(_ref_conv_transpose(x, raw["ct4_w"], raw["ct4_b"]))


# ----------------------------------------------------------------------------
# Deterministic synthetic parameters (shapes from the module's __init__).
# ----------------------------------------------------------------------------
def init_params(key, latent_dim, image_channels):
    ks = jax.random.split(key, 10)

    def w(k, shape, fan_in):
        return jax.random.normal(k, shape, jnp.float32) / jnp.sqrt(float(fan_in))

    def bias(k, n):
        return 0.01 * jax.random.normal(k, (n,), jnp.float32)

    return {
        "lin_w": w(ks[0], (256 * 16 * 16, latent_dim), latent_dim),  # PyTorch (out, in)
        "lin_b": bias(ks[1], 256 * 16 * 16),
        "ct1_w": w(ks[2], (256, 128, 4, 4), 256 * 16),               # (Cin, Cout, kH, kW)
        "ct1_b": bias(ks[3], 128),
        "ct2_w": w(ks[4], (128, 64, 4, 4), 128 * 16),
        "ct2_b": bias(ks[5], 64),
        "ct3_w": w(ks[6], (64, 32, 4, 4), 64 * 16),
        "ct3_b": bias(ks[7], 32),
        "ct4_w": w(ks[8], (32, image_channels, 4, 4), 32 * 16),
        "ct4_b": bias(ks[9], image_channels),
    }


if __name__ == "__main__":
    batch, latent_dim, image_channels = 2, 32, 3

    key = jax.random.PRNGKey(0)
    pkey, zkey, ckey = jax.random.split(key, 3)
    raw = init_params(pkey, latent_dim, image_channels)
    z = jax.random.normal(zkey, (batch, latent_dim), jnp.float32)

    params = prepare_params(raw)                 # weight repack hoisted, done once
    roll_sign = probe_roll_convention()          # pin the hardware rotate direction once

    # Per-layer check of the fused ConvTranspose2d kernel vs the f32 reference
    # (catches any flip/parity/shift mistake independently of the end-to-end check).
    layer_cfgs = [(1, "relu", 256, 16), (2, "relu", 128, 32),
                  (3, "relu", 64, 64), (4, "sigmoid", 32, 128)]
    for idx, act, cin, hw in layer_cfgs:
        kx = jax.random.fold_in(ckey, idx)
        xt = 0.1 * jax.random.normal(kx, (batch, cin, hw, hw), jnp.float32)
        ref_y = _ref_conv_transpose(xt, raw[f"ct{idx}_w"], raw[f"ct{idx}_b"])
        ref_y = jax.nn.relu(ref_y) if act == "relu" else jax.nn.sigmoid(ref_y)
        layer_fn = jax.jit(functools.partial(
            conv_transpose_subpixel, activation=act, roll_sign=roll_sign,
            out_dtype=jnp.float32, channels_major_out=False))
        got = layer_fn(jnp.transpose(xt, (1, 0, 2, 3)),
                       params[f"w{idx}"], params[f"b{idx}"])
        err = float(jnp.max(jnp.abs(got - ref_y)))
        assert err < 2.5e-2, f"layer {idx} max abs err vs reference: {err}"

    fwd = jax.jit(functools.partial(decoder_forward, roll_sign=roll_sign))
    out = jax.block_until_ready(fwd(z, params))

    assert out.shape == (batch, image_channels, 256, 256), out.shape
    assert out.dtype == jnp.float32
    assert bool(jnp.all(jnp.isfinite(out)))
    assert bool(jnp.all((out >= 0.0) & (out <= 1.0)))   # sigmoid output range

    # End-to-end numerical check against the plain-JAX f32 reference
    # (bf16 operands + f32 accumulation -> small tolerance).
    ref = jax.block_until_ready(jax.jit(decoder_reference)(z, raw))
    max_err = float(jnp.max(jnp.abs(out - ref)))
    assert max_err < 5e-2, f"max abs err vs reference: {max_err}"

    print("KERNEL_OK")
</pallas_src>

<mosaic_0001>
module attributes {stable_mosaic.version = 11 : i64} {
  func.func @_roll_probe_kernel(%arg0: memref<8x128xf32, #tpu.memory_space<vmem>>, %arg1: memref<8x128xf32, #tpu.memory_space<vmem>>) attributes {dimension_semantics = [], scalar_prefetch = 0 : i64, scratch_operands = 0 : i64, tpu.core_type = #tpu.core_type<tc>} {
    %c0 = arith.constant 0 : index
    %c0_0 = arith.constant 0 : index
    %0 = vector.load %arg0[%c0, %c0_0] : memref<8x128xf32, #tpu.memory_space<vmem>>, vector<8x128xf32>
    %c1_i32 = arith.constant 1 : i32
    %1 = tpu.dynamic_rotate %0 by %c1_i32 dim 1 : vector<8x128xf32>, i32 -> vector<8x128xf32>
    %c0_1 = arith.constant 0 : index
    %c0_2 = arith.constant 0 : index
    %2 = vector.load %arg1[%c0_1, %c0_2] : memref<8x128xf32, #tpu.memory_space<vmem>>, vector<8x128xf32>
    tpu.vector_store %arg1[%c0_1, %c0_2], %1 {strides = array<i32>} : memref<8x128xf32, #tpu.memory_space<vmem>>, vector<8x128xf32>,
    return
  }
}

</mosaic_0001>

<llo_original>
// kernel: tpu_custom_call.1
$region0: #{tpu_custom_call.1}
  #allocation0 [shape = 'u32[]', space=smem, size = 0x4, offset = 0x4, fixed_abs, tag = 'smem constant byte address 0x4 - core index']
  #allocation1 [shape = 'u32[144,128]{1,0:T(1,128)}', space=vmem, size = 0x12000, scoped, tag = 'internal scratch']
  %s0 = inlined_call_operand.hbm [shape: f32[8,128], index: 0, kind: input, shape index: {}]
  %s1 = inlined_call_operand.hbm [shape: f32[8,128], index: 1, kind: output, shape index: {}]
  %s2 = sld [smem:[#allocation0]]
  $region18: #{tpu_custom_call.1} parent=0
    _
  %s4 = ssub.s32 1, %s2
  %s5 = scalar_select 0, %s4, %s2
  $region1: #{tpu_custom_call.1} parent=0
    #allocation2 [shape = 'u8[4096]{0}', space=vmem, size = 0x1000, scoped, tag = 'input window, operand 0, single buffered']
    #allocation3 [shape = 's32[1]{0}', space=sflag, size = 0x4, scoped, tag = 'scoped memory for tpu_custom_call.1']
    #allocation4 [shape = 's32[1]{0}', space=sflag, size = 0x4, scoped, tag = 'scoped memory for tpu_custom_call.1']
    #allocation5 [shape = 'u8[4096]{0}', space=vmem, size = 0x1000, scoped, tag = 'output window, operand 0, single buffered']
    %6 = vsyncpa [#allocation3], 0
    %7 = vsyncpa [#allocation4], 0
    // Predicated region
    $region2: #{tpu_custom_call.1} parent=1 // pred_check
      _
    $region3: #{tpu_custom_call.1} parent=1 // pred_check_branch
      %9 = sbr.rel (0) target = $region5
    $region4: #{tpu_custom_call.1} parent=1 // pred_region
      %s11 = ssub.s32 128, 128
      %12 = vsyncadd [#allocation3], %s11
      %s14 = sshll.u32 [#allocation2], 4
      %s15 = int_to_ptr.vmem [resolvable:$true] %s14
      %17 = dma.hbm_to_vmem [thread:$0]  %s0, 128, %s15, [#allocation3]
    $region5: #{tpu_custom_call.1} parent=1 // pred_fallthru
      _
    // Predicated region
    $region6: #{tpu_custom_call.1} parent=1 // pred_check
      _
    $region7: #{tpu_custom_call.1} parent=1 // pred_check_branch
      %19 = sbr.rel (0) target = $region9
    $region8: #{tpu_custom_call.1} parent=1 // pred_region
      %20 = dma.done [#allocation3], 128
    $region9: #{tpu_custom_call.1} parent=1 // pred_fallthru
      _
    %v21 = vld [vmem:[#allocation2] sm:$0xff]
    %22 = vrot.lane.b32.xlu0 %v21, 1
    %v23 = vpop.permute.xlu0 %22
    %24 = vst [vmem:[#allocation5] sm:$0xff] %v23
    // Predicated region
    $region10: #{tpu_custom_call.1} parent=1 // pred_check
      _
    $region11: #{tpu_custom_call.1} parent=1 // pred_check_branch
      %26 = sbr.rel (0) target = $region13
    $region12: #{tpu_custom_call.1} parent=1 // pred_region
      %s28 = ssub.s32 128, 128
      %29 = vsyncadd [#allocation4], %s28
      %s31 = sshll.u32 [#allocation5], 4
      %s32 = int_to_ptr.vmem [resolvable:$true] %s31
      %34 = dma.vmem_to_hbm [thread:$0]  %s32, 128, %s1, [#allocation4]
    $region13: #{tpu_custom_call.1} parent=1 // pred_fallthru
      _
    // Predicated region
    $region14: #{tpu_custom_call.1} parent=1 // pred_check
      _
    $region15: #{tpu_custom_call.1} parent=1 // pred_check_branch
      %36 = sbr.rel (0) target = $region17
    $region16: #{tpu_custom_call.1} parent=1 // pred_region
      %37 = dma.done [#allocation4], 128
    $region17: #{tpu_custom_call.1} parent=1 // pred_fallthru
      _
    %38 = vsyncpa [#allocation3], 1
    %39 = vsyncpa [#allocation4], 1

</llo_original>
